<compile_context>
chip_gen: v7x
topology: tpu7x:2x2x1
jax: 0.10.0
libtpu: 0.0.40
codegen_flags: <defaults>
</compile_context>

<pallas_src>
import jax
import jax.numpy as jnp
from jax.experimental import pallas as pl
from jax.experimental.pallas import tpu as pltpu


# --------------------------------------------------------------------------
# Pallas kernel: fused 1x1-conv -> sigmoid -> channel-wise excite
# --------------------------------------------------------------------------
def spatial_se_kernel(x_ref, w_ref, b_ref, o_ref):
  """One spatial tile.

  x_ref : (N, C, T)  input activations (C on sublanes, T on lanes)
  w_ref : (C, 1)     1x1 conv weights (single output channel)
  b_ref : (1,)       conv bias (SMEM scalar)
  o_ref : (N, C, T)  gated output
  """
  x = x_ref[...]                                        # (N, C, T) f32
  w = w_ref[...]                                        # (C, 1)

  # per-pixel dot product over channels == Conv2d(C, 1, kernel_size=1)
  logits = jnp.sum(x * w[None, :, :], axis=1, keepdims=True) + b_ref[0]  # (N,1,T)

  # sigmoid written explicitly: exp on the EUP, the rest on the VPU.
  gate = 1.0 / (1.0 + jnp.exp(-logits))                 # (N, 1, T)

  o_ref[...] = x * gate                                 # broadcast over channels


# --------------------------------------------------------------------------
# Wrapper
# --------------------------------------------------------------------------
def _spatial_tile(hw, max_lanes=4096):
  """Lane-axis tile: full extent if small/ragged, else a multiple of 128 dividing hw."""
  if hw <= max_lanes or hw % 128 != 0:
    return hw
  t = max_lanes - (max_lanes % 128)
  while hw % t != 0:
    t -= 128
  return t


def spatial_se_pallas(x_nchw, w_col, b_vec):
  N, C, H, W = x_nchw.shape
  HW = H * W
  T = _spatial_tile(HW)
  grid = (HW // T,)

  x = x_nchw.reshape(N, C, HW)

  out = pl.pallas_call(
      spatial_se_kernel,
      out_shape=jax.ShapeDtypeStruct((N, C, HW), x.dtype),
      grid_spec=pltpu.PrefetchScalarGridSpec(
          num_scalar_prefetch=0,
          grid=grid,
          in_specs=[
              pl.BlockSpec((N, C, T), lambda i: (0, 0, i)),
              pl.BlockSpec((C, 1), lambda i: (0, 0)),
              pl.BlockSpec(memory_space=pltpu.MemorySpace.SMEM),
          ],
          out_specs=pl.BlockSpec((N, C, T), lambda i: (0, 0, i)),
      ),
      compiler_params=pltpu.CompilerParams(
          dimension_semantics=("parallel",)),
  )(x, w_col, b_vec)

  return out.reshape(N, C, H, W)


@jax.jit
def spatial_se_forward(input_tensor, conv_weight, conv_bias, weights=None):
  """Matches SpatialSELayer.forward.

  input_tensor : (N, C, H, W)
  conv_weight  : (1, C, 1, 1)  -- nn.Conv2d(num_channels, 1, 1).weight
  conv_bias    : (1,)          -- nn.Conv2d(num_channels, 1, 1).bias
  weights      : optional few-shot weights; mean over dim 0 is used, no bias.
  """
  N, C, H, W = input_tensor.shape
  if weights is not None:
    w_col = jnp.mean(weights, axis=0).reshape(C, 1).astype(jnp.float32)
    b_vec = jnp.zeros((1,), jnp.float32)
  else:
    w_col = conv_weight.reshape(C, 1).astype(jnp.float32)
    b_vec = conv_bias.reshape(1).astype(jnp.float32)

  x = input_tensor.astype(jnp.float32)
  return spatial_se_pallas(x, w_col, b_vec).astype(input_tensor.dtype)


# --------------------------------------------------------------------------
# Demo
# --------------------------------------------------------------------------
if __name__ == "__main__":
  key = jax.random.PRNGKey(0)
  k1, k2, k3 = jax.random.split(key, 3)

  N, C, H, W = 2, 4, 16, 16
  x = jax.random.normal(k1, (N, C, H, W), jnp.float32)
  conv_w = 0.5 * jax.random.normal(k2, (1, C, 1, 1), jnp.float32)
  conv_b = 0.1 * jax.random.normal(k3, (1,), jnp.float32)

  out = spatial_se_forward(x, conv_w, conv_b)
  out = jax.block_until_ready(out)

  # Pure-JAX reference (same math as the PyTorch module's default path).
  logits = jnp.einsum("nchw,c->nhw", x, conv_w.reshape(C)) + conv_b[0]
  ref = x * jax.nn.sigmoid(logits)[:, None, :, :]

  assert out.shape == (N, C, H, W), out.shape
  assert bool(jnp.all(jnp.isfinite(out)))
  assert bool(jnp.allclose(out, ref, atol=1e-5, rtol=1e-5)), \
      float(jnp.max(jnp.abs(out - ref)))
  print("KERNEL_OK")
</pallas_src>

<mosaic_0001>
module attributes {stable_mosaic.version = 11 : i64} {
  func.func @spatial_se_kernel(%arg0: i32, %arg1: memref<2x4x256xf32, #tpu.memory_space<vmem>>, %arg2: memref<4x1xf32, #tpu.memory_space<vmem>>, %arg3: memref<1xf32, #tpu.memory_space<smem>>, %arg4: memref<2x4x256xf32, #tpu.memory_space<vmem>>) attributes {dimension_semantics = [#tpu.dimension_semantics<parallel>], iteration_bounds = array<i64: 1>, scalar_prefetch = 0 : i64, scratch_operands = 0 : i64, tpu.core_type = #tpu.core_type<tc>, window_params = [{transform_indices = @transform_0, window_bounds = array<i64: 2, 4, 256>}, {pipeline_mode = #tpu.pipeline_mode<synchronous>, transform_indices = @transform_1, window_bounds = array<i64: 4, 1>}, {transform_indices = @transform_2, window_bounds = array<i64: 1>}, {transform_indices = @transform_3, window_bounds = array<i64: 2, 4, 256>}]} {
    %c0 = arith.constant 0 : index
    %c0_0 = arith.constant 0 : index
    %c0_1 = arith.constant 0 : index
    %0 = vector.load %arg1[%c0, %c0_0, %c0_1] : memref<2x4x256xf32, #tpu.memory_space<vmem>>, vector<2x4x256xf32>
    %c0_2 = arith.constant 0 : index
    %c0_3 = arith.constant 0 : index
    %1 = vector.load %arg2[%c0_2, %c0_3] : memref<4x1xf32, #tpu.memory_space<vmem>>, vector<4x1xf32>
    %2 = vector.shape_cast %1 : vector<4x1xf32> to vector<1x4x1xf32>
    %3 = vector.broadcast %2 : vector<1x4x1xf32> to vector<2x4x256xf32>
    %4 = arith.mulf %0, %3 : vector<2x4x256xf32>
    %cst = arith.constant dense<0.000000e+00> : vector<2x256xf32>
    %5 = vector.multi_reduction <add>, %4, %cst [1] : vector<2x4x256xf32> to vector<2x256xf32>
    %6 = vector.shape_cast %5 : vector<2x256xf32> to vector<2x1x256xf32>
    %c0_4 = arith.constant 0 : index
    %7 = memref.load %arg3[%c0_4] : memref<1xf32, #tpu.memory_space<smem>>
    %8 = vector.broadcast %7 : f32 to vector<2x1x256xf32>
    %9 = arith.addf %6, %8 : vector<2x1x256xf32>
    %cst_5 = arith.constant 0.000000e+00 : f32
    %10 = vector.broadcast %cst_5 : f32 to vector<2x1x256xf32>
    %11 = arith.subf %10, %9 : vector<2x1x256xf32>
    %12 = math.exp %11 : vector<2x1x256xf32>
    %cst_6 = arith.constant 1.000000e+00 : f32
    %13 = vector.broadcast %cst_6 : f32 to vector<2x1x256xf32>
    %14 = arith.addf %13, %12 : vector<2x1x256xf32>
    %cst_7 = arith.constant 1.000000e+00 : f32
    %15 = vector.broadcast %cst_7 : f32 to vector<2x1x256xf32>
    %16 = arith.divf %15, %14 : vector<2x1x256xf32>
    %17 = vector.broadcast %16 : vector<2x1x256xf32> to vector<2x4x256xf32>
    %18 = arith.mulf %0, %17 : vector<2x4x256xf32>
    %c0_8 = arith.constant 0 : index
    %c0_9 = arith.constant 0 : index
    %c0_10 = arith.constant 0 : index
    %19 = vector.load %arg4[%c0_8, %c0_9, %c0_10] : memref<2x4x256xf32, #tpu.memory_space<vmem>>, vector<2x4x256xf32>
    tpu.vector_store %arg4[%c0_8, %c0_9, %c0_10], %18 {strides = array<i32>} : memref<2x4x256xf32, #tpu.memory_space<vmem>>, vector<2x4x256xf32>,
    return
  }
  func.func @transform_0(%arg0: i32) -> (i32, i32, i32) {
    %c0_i32 = arith.constant 0 : i32
    %c0_i32_0 = arith.constant 0 : i32
    %c0_i32_1 = arith.constant 0 : i32
    return %c0_i32, %c0_i32_0, %arg0 : i32, i32, i32
  }
  func.func @transform_1(%arg0: i32) -> (i32, i32) {
    %c0_i32 = arith.constant 0 : i32
    %c0_i32_0 = arith.constant 0 : i32
    %c0_i32_1 = arith.constant 0 : i32
    return %c0_i32, %c0_i32_0 : i32, i32
  }
  func.func @transform_2(%arg0: i32) -> i32 {
    %c0_i32 = arith.constant 0 : i32
    %c0_i32_0 = arith.constant 0 : i32
    return %c0_i32 : i32
  }
  func.func @transform_3(%arg0: i32) -> (i32, i32, i32) {
    %c0_i32 = arith.constant 0 : i32
    %c0_i32_0 = arith.constant 0 : i32
    %c0_i32_1 = arith.constant 0 : i32
    return %c0_i32, %c0_i32_0, %arg0 : i32, i32, i32
  }
}

</mosaic_0001>

<llo_original>
// kernel: spatial_se_forward.1
$region0: #{spatial_se_forward.1}
  #allocation0 [shape = 'u32[]', space=smem, size = 0x4, offset = 0x4, fixed_abs, tag = 'smem constant byte address 0x4 - core index']
  #allocation1 [shape = 'u32[144,128]{1,0:T(1,128)}', space=vmem, size = 0x12000, scoped, tag = 'internal scratch']
  #allocation2 [shape = 'f32[1]{0:T(128)S(6)}', space=smem, size = 0x200, scoped, tag = 'scoped memory for spatial_se_forward.1']
  %s0 = inlined_call_operand.vmem [shape: f32[2,4,256], index: 0, kind: input, shape index: {}]
  %s1 = inlined_call_operand.vmem [shape: f32[4,1], index: 1, kind: input, shape index: {}]
  %s2 = inlined_call_operand.<no memory space> [shape: f32[1], index: 2, kind: input, shape index: {}]
  %s3 = inlined_call_operand.vmem [shape: f32[2,4,256], index: 3, kind: output, shape index: {}]
  %s4 = sld [smem:[#allocation0]]
  $region22: #{spatial_se_forward.1} parent=0
    _
  %s6 = ssub.s32 1, %s4
  %s7 = scalar_select 0, %s6, %s4
  %8 = sst [smem:[#allocation2]] %s2
  // Predicated region
  $region2: #{spatial_se_forward.1} parent=0 // pred_check
    _
  $region3: #{spatial_se_forward.1} parent=0 // pred_check_branch
    %10 = sbr.rel (0) target = $region5
  $region4: #{spatial_se_forward.1} parent=0 // pred_region
    _
  $region5: #{spatial_se_forward.1} parent=0 // pred_fallthru
    _
  // Predicated region
  $region6: #{spatial_se_forward.1} parent=0 // pred_check
    _
  $region7: #{spatial_se_forward.1} parent=0 // pred_check_branch
    %12 = sbr.rel (0) target = $region9
  $region8: #{spatial_se_forward.1} parent=0 // pred_region
    _
  $region9: #{spatial_se_forward.1} parent=0 // pred_fallthru
    _
  // Predicated region
  $region10: #{spatial_se_forward.1} parent=0 // pred_check
    _
  $region11: #{spatial_se_forward.1} parent=0 // pred_check_branch
    %14 = sbr.rel (0) target = $region13
  $region12: #{spatial_se_forward.1} parent=0 // pred_region
    _
  $region13: #{spatial_se_forward.1} parent=0 // pred_fallthru
    _
  %v15 = vld [vmem:[%s0] sm:$0xff]
  %v16 = vld [vmem:[%s0 + $0x8] sm:$0xff]
  %v17 = vld [vmem:[%s1] sm:$0xf]
  %19 = vset.pattern.permute.xlu0 0
  %20 = vperm.xlu0 %19, %v17
  %v21 = vpop.permute.xlu0 %20
  %v23 = vunpack.c.l.s4 839922192
  %v24 = vunpack.c.0.s8 %v23
  %v25 = vlaneseq
  %v26 = vshrl.u32 %v25, 7
  %v27 = vsub.s32 %v24, %v26
  %v28 = vrot.slane %v21, %v27
  %v30 = vmul.f32 %v15, %v28
  %v31 = vmul.f32 %v16, %v28
  %v34 = vcombine.high %v30, %v30
  %v35 = vcombine.high %v31, %v31
  %vm38 = vcmask 1043456
  %v39 = vsel %vm38, %v30, 0.0
  %v40 = vrot.slane %v39, 4
  %v41 = vadd.f32 %v39, %v40
  %v42 = vrot.slane %v41, 2
  %v43 = vadd.f32 %v41, %v42
  %v44 = vrot.slane %v43, 1
  %v45 = vadd.f32 %v43, %v44
  %v46 = vsel %vm38, %v34, 0.0
  %v47 = vrot.slane %v46, 4
  %v48 = vadd.f32 %v46, %v47
  %v49 = vrot.slane %v48, 2
  %v50 = vadd.f32 %v48, %v49
  %v51 = vrot.slane %v50, 1
  %v52 = vadd.f32 %v50, %v51
  %v53 = vsel %vm38, %v31, 0.0
  %v54 = vrot.slane %v53, 4
  %v55 = vadd.f32 %v53, %v54
  %v56 = vrot.slane %v55, 2
  %v57 = vadd.f32 %v55, %v56
  %v58 = vrot.slane %v57, 1
  %v59 = vadd.f32 %v57, %v58
  %v60 = vsel %vm38, %v35, 0.0
  %v61 = vrot.slane %v60, 4
  %v62 = vadd.f32 %v60, %v61
  %v63 = vrot.slane %v62, 2
  %v64 = vadd.f32 %v62, %v63
  %v65 = vrot.slane %v64, 1
  %v66 = vadd.f32 %v64, %v65
  %s67 = sld [smem:[#allocation2]]
  %v68 = vstv %s67
  %v69 = vadd.f32 %v45, %v68
  %v70 = vadd.f32 %v52, %v68
  %v71 = vadd.f32 %v59, %v68
  %v72 = vadd.f32 %v66, %v68
  %v73 = vsub.f32 0.0, %v69
  %v74 = vsub.f32 0.0, %v70
  %v75 = vsub.f32 0.0, %v71
  %v76 = vsub.f32 0.0, %v72
  %v77 = vmul.f32 %v73, 1.442695
  %v78 = vpow.pop %v77
  %v79 = vmul.f32 %v74, 1.442695
  %v80 = vpow.pop %v79
  %v81 = vmul.f32 %v75, 1.442695
  %v82 = vpow.pop %v81
  %v83 = vmul.f32 %v76, 1.442695
  %v84 = vpow.pop %v83
  %v85 = vadd.f32 %v78, 1.0
  %v86 = vadd.f32 %v80, 1.0
  %v87 = vadd.f32 %v82, 1.0
  %v88 = vadd.f32 %v84, 1.0
  %v89 = vrcp.pop %v85
  %v90 = vmul.f32 1.0, %v89
  %v91 = vrcp.pop %v86
  %v92 = vmul.f32 1.0, %v91
  %v93 = vrcp.pop %v87
  %v94 = vmul.f32 1.0, %v93
  %v95 = vrcp.pop %v88
  %v96 = vmul.f32 1.0, %v95
  %v101 = vcombine.low %v90, %v92
  %v102 = vcombine.low %v94, %v96
  %v105 = vmul.f32 %v15, %v101
  %v106 = vmul.f32 %v16, %v102
  %107 = vst [vmem:[%s3] sm:$0xff] %v105
  %108 = vst [vmem:[%s3 + $0x8] sm:$0xff] %v106
  // Predicated region
  $region14: #{spatial_se_forward.1} parent=0 // pred_check
    _
  $region15: #{spatial_se_forward.1} parent=0 // pred_check_branch
    %110 = sbr.rel (0) target = $region17
  $region16: #{spatial_se_forward.1} parent=0 // pred_region
    _
  $region17: #{spatial_se_forward.1} parent=0 // pred_fallthru
    _
  // Predicated region
  $region18: #{spatial_se_forward.1} parent=0 // pred_check
    _
  $region19: #{spatial_se_forward.1} parent=0 // pred_check_branch
    %112 = sbr.rel (0) target = $region21
  $region20: #{spatial_se_forward.1} parent=0 // pred_region
    _
  $region21: #{spatial_se_forward.1} parent=0 // pred_fallthru
    _

</llo_original>
